<compile_context>
chip_gen: v7x
topology: tpu7x:2x2x1
jax: 0.10.0
libtpu: 0.0.40
codegen_flags: <defaults>
</compile_context>

<pallas_src>
import functools

import jax
import jax.numpy as jnp
from jax.experimental import pallas as pl
from jax.experimental.pallas import tpu as pltpu


def _round_up(a, b):
    return (a + b - 1) // b * b


def _sublane(dtype):
    # Min second-to-last block multiple: 8 (f32), 16 (bf16), 32 (int8/fp8).
    return max(8, 32 // jnp.dtype(dtype).itemsize)


def _tpu_vmem_capacity_bytes():
    """Physical VMEM per TensorCore; conservative 64 MiB fallback (fits v7x)."""
    try:
        return int(pltpu.get_tpu_info().vmem_capacity_bytes)
    except Exception:
        return 64 << 20


# --------------------------------------------------------------------------- #
# Kernels
# --------------------------------------------------------------------------- #
def mlp_kernel_out_acc(x_ref, w1_ref, b1_ref, w2_ref, b2_ref, o_ref):
    """f32 output: accumulate fc2 partials directly into the resident output
    block (index_map ignores f), so no separate accumulator scratch is needed."""
    f = pl.program_id(1)

    @pl.when(f == 0)
    def _init():
        o_ref[...] = jnp.zeros_like(o_ref)

    # fc1 partial for this F slab: [TN, E] @ [E, TF] -> f32 on the MXU.
    h = jnp.dot(x_ref[...], w1_ref[...], preferred_element_type=jnp.float32)
    # Bias + ReLU (b1 slab broadcasts (1, TF) -> (TN, TF); exact per-column op).
    h = jnp.maximum(h + b1_ref[...], 0.0)
    # fc2 partial product accumulated into the resident f32 output block.
    o_ref[...] += jnp.dot(h.astype(w2_ref.dtype), w2_ref[...],
                          preferred_element_type=jnp.float32)

    @pl.when(f == pl.num_programs(1) - 1)
    def _finalize():
        o_ref[...] += b2_ref[...]


def mlp_kernel_scratch_acc(x_ref, w1_ref, b1_ref, w2_ref, b2_ref, o_ref,
                           acc_ref):
    """Narrow (e.g. bf16) output: accumulate in an f32 VMEM scratch and cast
    once at the last F slab."""
    f = pl.program_id(1)

    @pl.when(f == 0)
    def _init():
        acc_ref[...] = jnp.zeros_like(acc_ref)

    h = jnp.dot(x_ref[...], w1_ref[...], preferred_element_type=jnp.float32)
    h = jnp.maximum(h + b1_ref[...], 0.0)
    acc_ref[...] += jnp.dot(h.astype(w2_ref.dtype), w2_ref[...],
                            preferred_element_type=jnp.float32)

    @pl.when(f == pl.num_programs(1) - 1)
    def _finalize():
        o_ref[...] = (acc_ref[...] + b2_ref[...]).astype(o_ref.dtype)


# --------------------------------------------------------------------------- #
# Wrapper
# --------------------------------------------------------------------------- #
@functools.partial(jax.jit, static_argnames=("tn", "tf", "compute_dtype"))
def mlp_forward(x, w1, b1, w2, b2, *, tn=None, tf=None, compute_dtype=None):
    """x: [batch, seq, embed]; returns [batch, seq, embed] in x.dtype.

    compute_dtype: optional narrower matmul dtype (e.g. jnp.bfloat16) for the
    x/w1/w2 operands; accumulation stays f32. Deliberate precision deviation —
    opt-in only.
    """
    B, S, E = x.shape
    Ew, F = w1.shape
    assert Ew == E and w2.shape == (F, E)
    assert b1.shape == (1, F) and b2.shape == (1, E)
    out_dtype = x.dtype
    N = B * S
    x2d = x.reshape(N, E)

    if compute_dtype is not None:
        cd = jnp.dtype(compute_dtype)
        x2d = x2d.astype(cd)
        w1 = w1.astype(cd)
        w2 = w2.astype(cd)
        # Biases stay in their original dtype; bias adds happen in f32 anyway.

    x_item = jnp.dtype(x2d.dtype).itemsize
    w_item = jnp.dtype(w1.dtype).itemsize
    o_item = jnp.dtype(out_dtype).itemsize
    b_item = jnp.dtype(b1.dtype).itemsize
    sub = _sublane(x2d.dtype)

    # ---- generation-aware VMEM budget ------------------------------------ #
    phys_vmem = _tpu_vmem_capacity_bytes()
    small_vmem = phys_vmem <= (96 << 20)          # v7x-class (64 MiB per TC)
    budget = int(phys_vmem * 0.8)

    # ---- F slab (TF) and padded F ----------------------------------------- #
    E_pad = _round_up(E, 128)
    F_pad_base = _round_up(F, 128)
    tf_req = _round_up(min(tf if tf is not None else 512, F_pad_base), 128)
    # Shrink the weight slab only if the double-buffered w1+w2 slabs alone
    # would eat ~half the budget (very large E); keep >=256 for the 256-wide
    # MXUs on v6e/v7x.
    while 4 * E_pad * tf_req * w_item > budget // 2 and tf_req > 256:
        tf_req = _round_up(tf_req // 2, 128)
    TF = tf_req
    # Pad F up to a TF multiple instead of shrinking TF (exact math).
    F_pad = _round_up(F_pad_base, TF)

    # ---- N tile (TN) ------------------------------------------------------- #
    N_sub = _round_up(N, sub)
    if tn is not None:
        TN = max(sub, min(_round_up(tn, sub), N_sub))
    else:
        # Per-F-step arithmetic intensity ~ 2*TN/itemsize FLOP per streamed
        # weight byte: size TN to clear each generation's HBM roofline.
        if small_vmem:                 # v7x: ~2x HBM BW, half the VMEM, 2 TCs
            TN = 768 if x_item >= 4 else 384
        else:                          # v5e / v6e: 128 MiB VMEM
            TN = 1536 if x_item >= 4 else 768
        TN = min(TN, N_sub)
        # v7x megacore: keep grid[0] >= 2 so the "parallel" axis feeds both TCs.
        if small_vmem and N_sub >= 2 * sub:
            TN = min(TN, _round_up((N_sub + 1) // 2, sub))
        TN = max(TN, sub)

    out_is_f32 = (out_dtype == jnp.float32)

    def vmem_est(tn_):
        acc = 0 if out_is_f32 else tn_ * E_pad * 4
        return (2 * tn_ * E_pad * x_item          # x tiles (double-buffered)
                + 2 * tn_ * E_pad * o_item        # out tiles (double-buffered)
                + 2 * E_pad * TF * w_item         # w1 slab (double-buffered)
                + 2 * TF * E_pad * w_item         # w2 slab (double-buffered)
                + 2 * (TF + E_pad) * b_item       # biases
                + acc                             # f32 accumulator (narrow out)
                + 2 * tn_ * TF * 4)               # fc1 f32 intermediate + slack

    while vmem_est(TN) > budget and TN > sub:
        TN = max(sub, _round_up(TN // 2, sub))

    N_pad = _round_up(N, TN)

    # ---- zero-pad to aligned shapes (exact; no-op when already aligned) ---- #
    if N_pad != N or E_pad != E:
        x2d = jnp.pad(x2d, ((0, N_pad - N), (0, E_pad - E)))
    if E_pad != E or F_pad != F:
        w1 = jnp.pad(w1, ((0, E_pad - E), (0, F_pad - F)))
        w2 = jnp.pad(w2, ((0, F_pad - F), (0, E_pad - E)))
    if F_pad != F:
        b1 = jnp.pad(b1, ((0, 0), (0, F_pad - F)))
    if E_pad != E:
        b2 = jnp.pad(b2, ((0, 0), (0, E_pad - E)))

    grid = (N_pad // TN, F_pad // TF)

    # Advisory cost estimate so XLA schedules surrounding ops sensibly.
    cost = pl.CostEstimate(
        flops=4 * N_pad * E_pad * F_pad,  # two matmuls, 2*N*E*F each
        transcendentals=0,
        bytes_accessed=int(
            N_pad * E_pad * (x_item + o_item)                     # x in + out
            + grid[0] * (2 * E_pad * F_pad * w_item + F_pad * b_item)
            + E_pad * b_item))

    vmem_limit = min(max(int(vmem_est(TN) * 1.25) + (2 << 20), 16 << 20),
                     int(phys_vmem * 0.9))

    kernel = mlp_kernel_out_acc if out_is_f32 else mlp_kernel_scratch_acc
    scratch = [] if out_is_f32 else [pltpu.VMEM((TN, E_pad), jnp.float32)]

    out2d = pl.pallas_call(
        kernel,
        out_shape=jax.ShapeDtypeStruct((N_pad, E_pad), out_dtype),
        grid_spec=pltpu.PrefetchScalarGridSpec(
            num_scalar_prefetch=0,
            grid=grid,
            in_specs=[
                pl.BlockSpec((TN, E_pad), lambda i, f: (i, 0)),   # x tile
                pl.BlockSpec((E_pad, TF), lambda i, f: (0, f)),   # w1 slab
                pl.BlockSpec((1, TF),     lambda i, f: (0, f)),   # b1 slab
                pl.BlockSpec((TF, E_pad), lambda i, f: (f, 0)),   # w2 slab
                pl.BlockSpec((1, E_pad),  lambda i, f: (0, 0)),   # b2 (resident)
            ],
            out_specs=pl.BlockSpec((TN, E_pad), lambda i, f: (i, 0)),
            scratch_shapes=scratch,
        ),
        compiler_params=pltpu.CompilerParams(
            dimension_semantics=("parallel", "arbitrary"),
            vmem_limit_bytes=vmem_limit),
        cost_estimate=cost,
    )(x2d, w1, b1, w2, b2)

    return out2d[:N, :E].reshape(B, S, E)


def init_params(key, embed_size, ff_size, dtype=jnp.float32):
    """Deterministic init matching nn.Linear shapes (stored transposed)."""
    k1, k2, k3, k4 = jax.random.split(key, 4)
    bound1 = 1.0 / (embed_size ** 0.5)
    bound2 = 1.0 / (ff_size ** 0.5)
    w1 = jax.random.uniform(k1, (embed_size, ff_size), dtype,
                            minval=-bound1, maxval=bound1)
    b1 = jax.random.uniform(k2, (1, ff_size), dtype,
                            minval=-bound1, maxval=bound1)
    w2 = jax.random.uniform(k3, (ff_size, embed_size), dtype,
                            minval=-bound2, maxval=bound2)
    b2 = jax.random.uniform(k4, (1, embed_size), dtype,
                            minval=-bound2, maxval=bound2)
    return w1, b1, w2, b2


if __name__ == "__main__":
    batch, seq, embed_size, ff_size = 2, 64, 128, 256

    key = jax.random.PRNGKey(0)
    kx, kp = jax.random.split(key)
    x = jax.random.normal(kx, (batch, seq, embed_size), jnp.float32)
    w1, b1, w2, b2 = init_params(kp, embed_size, ff_size, jnp.float32)

    ref = jnp.maximum(x @ w1 + b1[0], 0.0) @ w2 + b2[0]

    # 1) f32, auto tiling (direct-into-output accumulation path).
    out = jax.block_until_ready(mlp_forward(x, w1, b1, w2, b2))
    assert out.shape == (batch, seq, embed_size)
    assert jnp.allclose(out, ref, atol=1e-4, rtol=1e-4)

    # 2) Forced multi-step grid (N tiles x F slabs) to exercise the
    #    init/accumulate/finalize path of the output accumulator.
    out_t = jax.block_until_ready(mlp_forward(x, w1, b1, w2, b2, tn=64, tf=128))
    assert jnp.allclose(out_t, ref, atol=1e-4, rtol=1e-4)

    # 3) bf16 operands with f32 accumulation (scratch-accumulator path);
    #    dtype-aware tolerance vs the f32 reference.  Note: the fc1 activation
    #    is downcast to bf16 before the second matmul (deliberate deviation).
    xb, w1b, b1b, w2b, b2b = (a.astype(jnp.bfloat16)
                              for a in (x, w1, b1, w2, b2))
    out_bf16 = jax.block_until_ready(mlp_forward(xb, w1b, b1b, w2b, b2b))
    assert out_bf16.dtype == jnp.bfloat16
    assert jnp.allclose(out_bf16.astype(jnp.float32), ref, atol=8e-2, rtol=8e-2)
    out_bf16_t = jax.block_until_ready(
        mlp_forward(xb, w1b, b1b, w2b, b2b, tn=64, tf=128))
    assert jnp.allclose(out_bf16_t.astype(jnp.float32), ref,
                        atol=8e-2, rtol=8e-2)

    # 4) f32 storage with opt-in bf16 compute (halves streamed weight bytes on
    #    v6e/v7x); output dtype stays f32.
    out_cd = jax.block_until_ready(
        mlp_forward(x, w1, b1, w2, b2, compute_dtype=jnp.bfloat16))
    assert out_cd.dtype == jnp.float32
    assert jnp.allclose(out_cd, ref, atol=8e-2, rtol=8e-2)

    # 5) Non-128-aligned shapes exercise the zero-padding path.
    xs = jax.random.normal(kx, (2, 10, 96), jnp.float32)
    w1s, b1s, w2s, b2s = init_params(kp, 96, 200, jnp.float32)
    refs = jnp.maximum(xs @ w1s + b1s[0], 0.0) @ w2s + b2s[0]
    outs = jax.block_until_ready(mlp_forward(xs, w1s, b1s, w2s, b2s))
    assert jnp.allclose(outs, refs, atol=1e-4, rtol=1e-4)

    print("KERNEL_OK")
</pallas_src>

<mosaic_0001>
module attributes {stable_mosaic.version = 11 : i64} {
  func.func @mlp_kernel_out_acc(%arg0: i32, %arg1: i32, %arg2: memref<64x128xf32, #tpu.memory_space<vmem>>, %arg3: memref<128x256xf32, #tpu.memory_space<vmem>>, %arg4: memref<1x256xf32, #tpu.memory_space<vmem>>, %arg5: memref<256x128xf32, #tpu.memory_space<vmem>>, %arg6: memref<1x128xf32, #tpu.memory_space<vmem>>, %arg7: memref<64x128xf32, #tpu.memory_space<vmem>>) attributes {dimension_semantics = [#tpu.dimension_semantics<parallel>, #tpu.dimension_semantics<arbitrary>], iteration_bounds = array<i64: 2, 1>, scalar_prefetch = 0 : i64, scratch_operands = 0 : i64, tpu.core_type = #tpu.core_type<tc>, window_params = [{transform_indices = @transform_0, window_bounds = array<i64: 64, 128>}, {transform_indices = @transform_1, window_bounds = array<i64: 128, 256>}, {transform_indices = @transform_2, window_bounds = array<i64: 1, 256>}, {transform_indices = @transform_3, window_bounds = array<i64: 256, 128>}, {pipeline_mode = #tpu.pipeline_mode<synchronous>, transform_indices = @transform_4, window_bounds = array<i64: 1, 128>}, {transform_indices = @transform_5, window_bounds = array<i64: 64, 128>}]} {
    %c0_i32 = arith.constant 0 : i32
    %0 = arith.cmpi eq, %arg1, %c0_i32 : i32
    %1 = arith.extui %0 : i1 to i32
    %c0_i32_0 = arith.constant 0 : i32
    %2 = arith.cmpi ne, %1, %c0_i32_0 : i32
    scf.if %2 {
      %cst_16 = arith.constant 0.000000e+00 : f32
      %19 = vector.broadcast %cst_16 : f32 to vector<64x128xf32>
      %c0_17 = arith.constant 0 : index
      %c0_18 = arith.constant 0 : index
      %20 = vector.load %arg7[%c0_17, %c0_18] : memref<64x128xf32, #tpu.memory_space<vmem>>, vector<64x128xf32>
      tpu.vector_store %arg7[%c0_17, %c0_18], %19 {strides = array<i32>} : memref<64x128xf32, #tpu.memory_space<vmem>>, vector<64x128xf32>,
    } else {
    }
    %c0 = arith.constant 0 : index
    %c0_1 = arith.constant 0 : index
    %3 = vector.load %arg2[%c0, %c0_1] : memref<64x128xf32, #tpu.memory_space<vmem>>, vector<64x128xf32>
    %c0_2 = arith.constant 0 : index
    %c0_3 = arith.constant 0 : index
    %4 = vector.load %arg3[%c0_2, %c0_3] : memref<128x256xf32, #tpu.memory_space<vmem>>, vector<128x256xf32>
    %cst = arith.constant dense<0.000000e+00> : vector<64x256xf32>
    %5 = tpu.matmul %3, %4, %cst {dimension_numbers = #tpu.dot_dimension_numbers<[1], [0], [0], [1], [0, 0, 1, 1], [], []>} : vector<64x128xf32>, vector<128x256xf32>, vector<64x256xf32> -> vector<64x256xf32>
    %c0_4 = arith.constant 0 : index
    %c0_5 = arith.constant 0 : index
    %6 = vector.load %arg4[%c0_4, %c0_5] : memref<1x256xf32, #tpu.memory_space<vmem>>, vector<1x256xf32>
    %7 = vector.broadcast %6 : vector<1x256xf32> to vector<64x256xf32>
    %8 = arith.addf %5, %7 : vector<64x256xf32>
    %cst_6 = arith.constant 0.000000e+00 : f32
    %9 = vector.broadcast %cst_6 : f32 to vector<64x256xf32>
    %10 = arith.maximumf %8, %9 : vector<64x256xf32>
    %c0_7 = arith.constant 0 : index
    %c0_8 = arith.constant 0 : index
    %11 = vector.load %arg7[%c0_7, %c0_8] : memref<64x128xf32, #tpu.memory_space<vmem>>, vector<64x128xf32>
    %c0_9 = arith.constant 0 : index
    %c0_10 = arith.constant 0 : index
    %12 = vector.load %arg5[%c0_9, %c0_10] : memref<256x128xf32, #tpu.memory_space<vmem>>, vector<256x128xf32>
    %cst_11 = arith.constant dense<0.000000e+00> : vector<64x128xf32>
    %13 = tpu.matmul %10, %12, %cst_11 {dimension_numbers = #tpu.dot_dimension_numbers<[1], [0], [0], [1], [0, 0, 1, 1], [], []>} : vector<64x256xf32>, vector<256x128xf32>, vector<64x128xf32> -> vector<64x128xf32>
    %14 = arith.addf %11, %13 : vector<64x128xf32>
    %c0_12 = arith.constant 0 : index
    %c0_13 = arith.constant 0 : index
    %15 = vector.load %arg7[%c0_12, %c0_13] : memref<64x128xf32, #tpu.memory_space<vmem>>, vector<64x128xf32>
    tpu.vector_store %arg7[%c0_12, %c0_13], %14 {strides = array<i32>} : memref<64x128xf32, #tpu.memory_space<vmem>>, vector<64x128xf32>,
    %c0_i32_14 = arith.constant 0 : i32
    %16 = arith.cmpi eq, %arg1, %c0_i32_14 : i32
    %17 = arith.extui %16 : i1 to i32
    %c0_i32_15 = arith.constant 0 : i32
    %18 = arith.cmpi ne, %17, %c0_i32_15 : i32
    scf.if %18 {
      %c0_16 = arith.constant 0 : index
      %c0_17 = arith.constant 0 : index
      %19 = vector.load %arg7[%c0_16, %c0_17] : memref<64x128xf32, #tpu.memory_space<vmem>>, vector<64x128xf32>
      %c0_18 = arith.constant 0 : index
      %c0_19 = arith.constant 0 : index
      %20 = vector.load %arg6[%c0_18, %c0_19] : memref<1x128xf32, #tpu.memory_space<vmem>>, vector<1x128xf32>
      %21 = vector.broadcast %20 : vector<1x128xf32> to vector<64x128xf32>
      %22 = arith.addf %19, %21 : vector<64x128xf32>
      %c0_20 = arith.constant 0 : index
      %c0_21 = arith.constant 0 : index
      %23 = vector.load %arg7[%c0_20, %c0_21] : memref<64x128xf32, #tpu.memory_space<vmem>>, vector<64x128xf32>
      tpu.vector_store %arg7[%c0_20, %c0_21], %22 {strides = array<i32>} : memref<64x128xf32, #tpu.memory_space<vmem>>, vector<64x128xf32>,
    } else {
    }
    return
  }
  func.func @transform_0(%arg0: i32, %arg1: i32) -> (i32, i32) {
    %c0_i32 = arith.constant 0 : i32
    %c0_i32_0 = arith.constant 0 : i32
    return %arg0, %c0_i32 : i32, i32
  }
  func.func @transform_1(%arg0: i32, %arg1: i32) -> (i32, i32) {
    %c0_i32 = arith.constant 0 : i32
    %c0_i32_0 = arith.constant 0 : i32
    return %c0_i32, %arg1 : i32, i32
  }
  func.func @transform_2(%arg0: i32, %arg1: i32) -> (i32, i32) {
    %c0_i32 = arith.constant 0 : i32
    %c0_i32_0 = arith.constant 0 : i32
    return %c0_i32, %arg1 : i32, i32
  }
  func.func @transform_3(%arg0: i32, %arg1: i32) -> (i32, i32) {
    %c0_i32 = arith.constant 0 : i32
    %c0_i32_0 = arith.constant 0 : i32
    return %arg1, %c0_i32 : i32, i32
  }
  func.func @transform_4(%arg0: i32, %arg1: i32) -> (i32, i32) {
    %c0_i32 = arith.constant 0 : i32
    %c0_i32_0 = arith.constant 0 : i32
    %c0_i32_1 = arith.constant 0 : i32
    return %c0_i32, %c0_i32_0 : i32, i32
  }
  func.func @transform_5(%arg0: i32, %arg1: i32) -> (i32, i32) {
    %c0_i32 = arith.constant 0 : i32
    %c0_i32_0 = arith.constant 0 : i32
    return %arg0, %c0_i32 : i32, i32
  }
}

</mosaic_0001>

<llo_original>
// kernel: mlp_forward.1
$region0: #{mlp_forward.1}
  #allocation0 [shape = 'u32[]', space=smem, size = 0x4, offset = 0x4, fixed_abs, tag = 'smem constant byte address 0x4 - core index']
  #allocation1 [shape = 'u32[144,128]{1,0:T(1,128)}', space=vmem, size = 0x12000, scoped, tag = 'internal scratch']
  %s0 = inlined_call_operand.hbm [shape: f32[128,128], index: 0, kind: input, shape index: {}]
  %s1 = inlined_call_operand.hbm [shape: f32[128,256], index: 1, kind: input, shape index: {}]
  %s2 = inlined_call_operand.vmem [shape: f32[1,256], index: 2, kind: input, shape index: {}]
  %s3 = inlined_call_operand.hbm [shape: f32[256,128], index: 3, kind: input, shape index: {}]
  %s4 = inlined_call_operand.vmem [shape: f32[1,128], index: 4, kind: input, shape index: {}]
  %s5 = inlined_call_operand.hbm [shape: f32[128,128], index: 5, kind: output, shape index: {}]
  %s6 = sld [smem:[#allocation0]]
  $region73: #{mlp_forward.1} parent=0
    _
  %s8 = ssub.s32 1, %s6
  %s9 = scalar_select 0, %s8, %s6
  $region1: #{mlp_forward.1} parent=0
    #allocation2 [shape = 'u8[65536]{0}', space=vmem, size = 0x10000, scoped, tag = 'input window, operand 0']
    #allocation3 [shape = 's32[2]{0}', space=sflag, size = 0x8, scoped, tag = 'scoped memory for mlp_forward.1']
    #allocation4 [shape = 's32[2]{0}', space=sflag, size = 0x8, scoped, tag = 'scoped memory for mlp_forward.1']
    #allocation5 [shape = 'u8[131072]{0}', space=vmem, size = 0x20000, scoped, tag = 'input window, operand 1, single buffered']
    #allocation6 [shape = 's32[1]{0}', space=sflag, size = 0x4, scoped, tag = 'scoped memory for mlp_forward.1']
    #allocation7 [shape = 'u8[131072]{0}', space=vmem, size = 0x20000, scoped, tag = 'input window, operand 3, single buffered']
    #allocation8 [shape = 'u8[65536]{0}', space=vmem, size = 0x10000, scoped, tag = 'output window, operand 0']
    %10 = vsyncpa [#allocation3], 0
    %s11 = scalar_lea.sflag [#allocation3], 1
    %12 = vsyncpa %s11, 0
    %13 = vsyncpa [#allocation6], 0
    %14 = vsyncpa [#allocation4], 0
    %s15 = scalar_lea.sflag [#allocation4], 1
    %16 = vsyncpa %s15, 0
    loop: start=0, step=1, limit=4
    $region2: #{mlp_forward.1} parent=1 // loop_pre_header
      _
    $region3: #{mlp_forward.1} parent=1 // loop_header
      %s18 = sphi 0, %s22
      %p19 = scmp.ge.s32.totalorder %s18, 4
      %s25 = sphi 0, %s37
      %s26 = sphi 0, %s33
      %s27 = sphi 0, %s25
      %s28 = sphi 0, %s26
      %s29 = sphi 0, %s27
      %s30 = sphi 0, %s28
      %s40 = sphi 0, %s42
      %s43 = sphi 0, %s40
      %s44 = sphi 0, %s43
      %s60 = sphi 0, %s44
      %s66 = sphi 0, %s68
      %s69 = sphi 0, %s66
      %s70 = sphi 0, %s69
      %s86 = sphi 0, %s70
      %s92 = sphi 0, %s94
      %s95 = sphi 0, %s92
      %s96 = sphi 0, %s95
      %s112 = sphi 0, %s96
      %s118 = sphi 0, %s120
      %s121 = sphi 0, %s118
      %s122 = sphi 0, %s121
      %s138 = sphi 0, %s122
      %s142 = sphi 0, %s142
      %s144 = sphi 0, %s142
      %s145 = sphi 0, %s144
      %s159 = sphi 0, %s145
      %s165 = sphi 0, %s167
      %s168 = sphi 0, %s165
      %s169 = sphi 0, %s168
      %s185 = sphi 0, %s169
    $region4: #{mlp_forward.1} parent=1 // loop_header_branch
      %21 = sbr.rel (%p19) target = $region8
    $region5: #{mlp_forward.1} parent=1 // loop_body
      %s23 = ssub.s32 %s18, 1
      %s24 = ssub.s32 %s18, 2
      %s31 = sadd.s32 1, %s26
      %p32 = scmp.ge.s32.totalorder %s31, 1
      %s33 = scalar_select %p32, 0, %s31
      %s34 = sadd.s32 1, %s25
      %s35 = scalar_select %p32, %s34, %s25
      %p36 = scmp.ge.s32.totalorder %s35, 2
      %s37 = scalar_select %p36, 0, %s35
      %s38 = ssub.s32 %s25, %s37
      %p39 = scmp.eq.s32.totalorder %s38, 0
      %s41 = sadd.s32 %s40, 1
      %s42 = scalar_select %p39, %s40, %s41
      %p45 = pneg %p39
      %p46 = scmp.eq.s32.totalorder %s18, 1
      %p47 = por %p45, %p46
      %p48 = scmp.ne.s32.totalorder %s40, %s43
      %p49 = scmp.eq.s32.totalorder %s18, 0
      %p50 = por %p48, %p49
      %p51 = scmp.ne.s32.totalorder %s40, %s43
      %p52 = scmp.eq.s32.totalorder %s23, 1
      %p53 = por %p51, %p52
      %p54 = scmp.ne.s32.totalorder %s43, %s44
      %p55 = scmp.eq.s32.totalorder %s23, 0
      %p56 = por %p54, %p55
      %p57 = scmp.ne.s32.totalorder %s43, %s44
      %p58 = scmp.eq.s32.totalorder %s24, 1
      %p59 = por %p57, %p58
      %p61 = scmp.ne.s32.totalorder %s44, %s60
      %p62 = scmp.eq.s32.totalorder %s24, 0
      %p63 = por %p61, %p62
      %s64 = ssub.s32 %s26, %s33
      %p65 = scmp.eq.s32.totalorder %s64, 0
      %s67 = sadd.s32 %s66, 1
      %s68 = scalar_select %p65, %s66, %s67
      %p71 = pneg %p65
      %p72 = scmp.eq.s32.totalorder %s18, 1
      %p73 = por %p71, %p72
      %p74 = scmp.ne.s32.totalorder %s66, %s69
      %p75 = scmp.eq.s32.totalorder %s18, 0
      %p76 = por %p74, %p75
      %p77 = scmp.ne.s32.totalorder %s66, %s69
      %p78 = scmp.eq.s32.totalorder %s23, 1
      %p79 = por %p77, %p78
      %p80 = scmp.ne.s32.totalorder %s69, %s70
      %p81 = scmp.eq.s32.totalorder %s23, 0
      %p82 = por %p80, %p81
      %p83 = scmp.ne.s32.totalorder %s69, %s70
      %p84 = scmp.eq.s32.totalorder %s24, 1
      %p85 = por %p83, %p84
      %p87 = scmp.ne.s32.totalorder %s70, %s86
      %p88 = scmp.eq.s32.totalorder %s24, 0
      %p89 = por %p87, %p88
      %s90 = ssub.s32 %s26, %s33
      %p91 = scmp.eq.s32.totalorder %s90, 0
      %s93 = sadd.s32 %s92, 1
      %s94 = scalar_select %p91, %s92, %s93
      %p97 = pneg %p91
      %p98 = scmp.eq.s32.totalorder %s18, 1
      %p99 = por %p97, %p98
      %p100 = scmp.ne.s32.totalorder %s92, %s95
      %p101 = scmp.eq.s32.totalorder %s18, 0
      %p102 = por %p100, %p101
      %p103 = scmp.ne.s32.totalorder %s92, %s95
      %p104 = scmp.eq.s32.totalorder %s23, 1
      %p105 = por %p103, %p104
      %p106 = scmp.ne.s32.totalorder %s95, %s96
      %p107 = scmp.eq.s32.totalorder %s23, 0
      %p108 = por %p106, %p107
      %p109 = scmp.ne.s32.totalorder %s95, %s96
      %p110 = scmp.eq.s32.totalorder %s24, 1
      %p111 = por %p109, %p110
      %p113 = scmp.ne.s32.totalorder %s96, %s112
      %p114 = scmp.eq.s32.totalorder %s24, 0
      %p115 = por %p113, %p114
      %s116 = ssub.s32 %s26, %s33
      %p117 = scmp.eq.s32.totalorder %s116, 0
      %s119 = sadd.s32 %s118, 1
      %s120 = scalar_select %p117, %s118, %s119
      %p123 = pneg %p117
      %p124 = scmp.eq.s32.totalorder %s18, 1
      %p125 = por %p123, %p124
      %p126 = scmp.ne.s32.totalorder %s118, %s121
      %p127 = scmp.eq.s32.totalorder %s18, 0
      %p128 = por %p126, %p127
      %p129 = scmp.ne.s32.totalorder %s118, %s121
      %p130 = scmp.eq.s32.totalorder %s23, 1
      %p131 = por %p129, %p130
      %p132 = scmp.ne.s32.totalorder %s121, %s122
      %p133 = scmp.eq.s32.totalorder %s23, 0
      %p134 = por %p132, %p133
      %p135 = scmp.ne.s32.totalorder %s121, %s122
      %p136 = scmp.eq.s32.totalorder %s24, 1
      %p137 = por %p135, %p136
      %p139 = scmp.ne.s32.totalorder %s122, %s138
      %p140 = scmp.eq.s32.totalorder %s24, 0
      %p141 = por %p139, %p140
      %s143 = sadd.s32 %s142, 1
      %p146 = scmp.eq.s32.totalorder %s18, 1
      %p147 = scmp.ne.s32.totalorder %s142, %s144
      %p148 = scmp.eq.s32.totalorder %s18, 0
      %p149 = por %p147, %p148
      %p150 = scmp.ne.s32.totalorder %s142, %s144
      %p151 = scmp.eq.s32.totalorder %s23, 1
      %p152 = por %p150, %p151
      %p153 = scmp.ne.s32.totalorder %s144, %s145
      %p154 = scmp.eq.s32.totalorder %s23, 0
      %p155 = por %p153, %p154
      %p156 = scmp.ne.s32.totalorder %s144, %s145
      %p157 = scmp.eq.s32.totalorder %s24, 1
      %p158 = por %p156, %p157
      %p160 = scmp.ne.s32.totalorder %s145, %s159
      %p161 = scmp.eq.s32.totalorder %s24, 0
      %p162 = por %p160, %p161
      %s163 = ssub.s32 %s25, %s37
      %p164 = scmp.eq.s32.totalorder %s163, 0
      %s166 = sadd.s32 %s165, 1
      %s167 = scalar_select %p164, %s165, %s166
      %p170 = pneg %p164
      %p171 = scmp.eq.s32.totalorder %s18, 1
      %p172 = por %p170, %p171
      %p173 = scmp.ne.s32.totalorder %s165, %s168
      %p174 = scmp.eq.s32.totalorder %s18, 0
      %p175 = por %p173, %p174
      %p176 = scmp.ne.s32.totalorder %s165, %s168
      %p177 = scmp.eq.s32.totalorder %s23, 1
      %p178 = por %p176, %p177
      %p179 = scmp.ne.s32.totalorder %s168, %s169
      %p180 = scmp.eq.s32.totalorder %s23, 0
      %p181 = por %p179, %p180
      %p182 = scmp.ne.s32.totalorder %s168, %s169
      %p183 = scmp.eq.s32.totalorder %s24, 1
      %p184 = por %p182, %p183
      %p186 = scmp.ne.s32.totalorder %s169, %s185
      %p187 = scmp.eq.s32.totalorder %s24, 0
      %p188 = por %p186, %p187
      %p189 = scmp.le.s32.totalorder 1, %s18
      %p190 = scmp.lt.s32.totalorder %s18, 3
      %p191 = pnand %p189, %p190
      %p192 = pneg %p191
      // Predicated region
      $region9: #{mlp_forward.1} parent=5 // pred_check
        _
      $region10: #{mlp_forward.1} parent=5 // pred_check_branch
        %194 = sbr.rel (%p191) target = $region12
      $region11: #{mlp_forward.1} parent=5 // pred_region
        %s195 = ssub.s32 %s18, 1
        // Predicated region
        $region13: #{mlp_forward.1} parent=11 // pred_check
          %p196 = pneg %p82
        $region14: #{mlp_forward.1} parent=11 // pred_check_branch
          %198 = sbr.rel (%p196) target = $region16
        $region15: #{mlp_forward.1} parent=11 // pred_region
          %s199 = smul.u32 2, %s28
          %s201 = ssub.s32 4096, 4096
          %202 = vsyncadd [#allocation6], %s201
          %s203 = smul.addr %s199, 128
          %s204 = scalar_lea.hbm %s1, %s203
          %s205 = sshll.u32 [#allocation5], 4
          %s206 = int_to_ptr.vmem [resolvable:$true] %s205
          %211 = dma.hbm_to_vmem [thread:$0]  %s204, 4096, %s206, [#allocation6], 256, 256, 16
        $region16: #{mlp_forward.1} parent=11 // pred_fallthru
          _
        // Predicated region
        $region17: #{mlp_forward.1} parent=11 // pred_check
          %p212 = pneg %p108
        $region18: #{mlp_forward.1} parent=11 // pred_check_branch
          %214 = sbr.rel (%p212) target = $region20
        $region19: #{mlp_forward.1} parent=11 // pred_region
          %s215 = smul.u32 2, %s28
          %p216 = scmp.lt.s32.totalorder %s215, 1
          %s217 = scalar_select %p216, %s215, 1
          %s218 = scalar_lea.vmem %s2, %s217
          %s219 = smul.u32 2, %s28
        $region20: #{mlp_forward.1} parent=11 // pred_fallthru
          _
        // Predicated region
        $region21: #{mlp_forward.1} parent=11 // pred_check
          %p220 = pneg %p134
        $region22: #{mlp_forward.1} parent=11 // pred_check_branch
          %222 = sbr.rel (%p220) target = $region24
        $region23: #{mlp_forward.1} parent=11 // pred_region
          %s223 = smul.u32 32, %s28
          %s225 = ssub.s32 4096, 4096
          %226 = vsyncadd [#allocation6], %s225
          %s227 = smul.addr %s223, 128
          %s228 = scalar_lea.hbm %s3, %s227
          %s229 = sshll.u32 [#allocation7], 4
          %s230 = int_to_ptr.vmem [resolvable:$true] %s229
          %235 = dma.hbm_to_vmem [thread:$0]  %s228, 4096, %s230, [#allocation6], 128, 128, 8
        $region24: #{mlp_forward.1} parent=11 // pred_fallthru
          _
        // Predicated region
        $region25: #{mlp_forward.1} parent=11 // pred_check
          %p236 = pneg %p155
        $region26: #{mlp_forward.1} parent=11 // pred_check_branch
          %238 = sbr.rel (%p236) target = $region28
        $region27: #{mlp_forward.1} parent=11 // pred_region
          _
        $region28: #{mlp_forward.1} parent=11 // pred_fallthru
          _
      $region12: #{mlp_forward.1} parent=5 // pred_fallthru
        _
      %p239 = scmp.lt.s32.totalorder %s18, 2
      // Predicated region
      $region29: #{mlp_forward.1} parent=5 // pred_check
        %p240 = pneg %p239
      $region30: #{mlp_forward.1} parent=5 // pred_check_branch
        %242 = sbr.rel (%p240) target = $region32
      $region31: #{mlp_forward.1} parent=5 // pred_region
        // Predicated region
        $region33: #{mlp_forward.1} parent=31 // pred_check
          %p243 = pneg %p50
        $region34: #{mlp_forward.1} parent=31 // pred_check_branch
          %245 = sbr.rel (%p243) target = $region36
        $region35: #{mlp_forward.1} parent=31 // pred_region
          %s246 = sand.u32 %s40, 1
          %s247 = scalar_lea.sflag [#allocation3], %s246
          %s248 = sand.u32 %s40, 1
          %s249 = smul.addr %s248, 64
          %s250 = scalar_lea.vmem [#allocation2], %s249
          %s251 = smul.u32 8, %s25
          %s253 = ssub.s32 1024, 1024
          %254 = vsyncadd %s247, %s253
          %s255 = smul.addr %s251, 128
          %s256 = scalar_lea.hbm %s0, %s255
          %s257 = sshll.u32 %s250, 4
          %s258 = int_to_ptr.vmem [resolvable:$true] %s257
          %263 = dma.hbm_to_vmem [thread:$0]  %s256, 1024, %s258, %s247, 128, 128, 8
        $region36: #{mlp_forward.1} parent=31 // pred_fallthru
          _
      $region32: #{mlp_forward.1} parent=5 // pred_fallthru
        _
      %p264 = scmp.le.s32.totalorder 1, %s18
      %p265 = scmp.lt.s32.totalorder %s18, 3
      %p266 = pnand %p264, %p265
      %p267 = pneg %p266
      // Predicated region
      $region37: #{mlp_forward.1} parent=5 // pred_check
        _
      $region38: #{mlp_forward.1} parent=5 // pred_check_branch
        %269 = sbr.rel (%p266) target = $region40
      $region39: #{mlp_forward.1} parent=5 // pred_region
        %s270 = ssub.s32 %s18, 1
        %s271 = sand.u32 %s43, 1
        %s272 = scalar_lea.sflag [#allocation3], %s271
        %s273 = sand.u32 %s43, 1
        %s274 = smul.addr %s273, 64
        %s275 = scalar_lea.vmem [#allocation2], %s274
        // Predicated region
        $region41: #{mlp_forward.1} parent=39 // pred_check
          %p276 = pneg %p56
        $region42: #{mlp_forward.1} parent=39 // pred_check_branch
          %278 = sbr.rel (%p276) target = $region44
        $region43: #{mlp_forward.1} parent=39 // pred_region
          %279 = dma.done %s272, 1024
        $region44: #{mlp_forward.1} parent=39 // pred_fallthru
          _
        // Predicated region
        $region45: #{mlp_forward.1} parent=39 // pred_check
          %p280 = pneg %p82
        $region46: #{mlp_forward.1} parent=39 // pred_check_branch
          %282 = sbr.rel (%p280) target = $region48
        $region47: #{mlp_forward.1} parent=39 // pred_region
          %283 = dma.done [#allocation6], 4096
        $region48: #{mlp_forward.1} parent=39 // pred_fallthru
          _
        // Predicated region
        $region49: #{mlp_forward.1} parent=39 // pred_check
          %p284 = pneg %p134
        $region50: #{mlp_forward.1} parent=39 // pred_check_branch
          %286 = sbr.rel (%p284) target = $region52
        $region51: #{mlp_forward.1} parent=39 // pred_region
          %287 = dma.done [#allocation6], 4096
        $region52: #{mlp_forward.1} parent=39 // pred_fallthru
          _
        %s288 = sand.u32 %s43, 1
        %s289 = scalar_lea.sflag [#allocation3], %s288
        %s290 = sand.u32 %s43, 1
        %s291 = smul.addr %s290, 64
        %s292 = scalar_lea.vmem [#allocation2], %s291
        %p293 = pneg %p56
        %p294 = pneg %p53
        %p295 = pneg %p82
        %p296 = pneg %p79
        %s297 = smul.u32 2, %s28
        %p298 = scmp.lt.s32.totalorder %s297, 1
        %s299 = scalar_select %p298, %s297, 1
        %s300 = scalar_lea.vmem %s2, %s299
        %p301 = pneg %p108
        %p302 = pneg %p105
        %p303 = pneg %p134
        %p304 = pneg %p131
        %p305 = pneg %p155
        %p306 = pneg %p152
        %p307 = pneg %p181
        %p308 = pneg %p178
        %s309 = sand.u32 %s168, 1
        %s310 = scalar_lea.sflag [#allocation4], %s309
        %s311 = sand.u32 %s168, 1
        %s312 = smul.addr %s311, 64
        %s313 = scalar_lea.vmem [#allocation8], %s312
        %s314 = smul.u32 8, %s27
        %s315 = smul.u32 2, %s28
        %s316 = smul.u32 2, %s28
        %p317 = scmp.lt.s32.totalorder %s316, 1
        %s318 = scalar_select %p317, %s316, 1
        %s319 = scalar_lea.vmem %s2, %s318
        %s320 = smul.u32 2, %s28
        %s321 = smul.u32 32, %s28
        %s322 = smul.u32 8, %s27
        %p323 = scmp.eq.s32.totalorder %s28, 0
        // Predicated region
        $region53: #{mlp_forward.1} parent=39 // pred_check
          %p324 = pneg %p323
        $region54: #{mlp_forward.1} parent=39 // pred_check_branch
          %326 = sbr.rel (%p324) target = $region56
        $region55: #{mlp_forward.1} parent=39 // pred_region
          %327 = vst [vmem:[%s313] sm:$0xff] 0.0
          %328 = vst [vmem:[%s313 + $0x8] sm:$0xff] 0.0
          %329 = vst [vmem:[%s313 + $0x10] sm:$0xff] 0.0
          %330 = vst [vmem:[%s313 + $0x18] sm:$0xff] 0.0
          %331 = vst [vmem:[%s313 + $0x20] sm:$0xff] 0.0
          %332 = vst [vmem:[%s313 + $0x28] sm:$0xff] 0.0
          %333 = vst [vmem:[%s313 + $0x30] sm:$0xff] 0.0
          %334 = vst [vmem:[%s313 + $0x38] sm:$0xff] 0.0
        $region56: #{mlp_forward.1} parent=39 // pred_fallthru
          _
        %v335 = vld [vmem:[%s275] sm:$0xff]
        %v336 = vld [vmem:[%s275 + $0x8] sm:$0xff]
        %v337 = vld [vmem:[%s275 + $0x10] sm:$0xff]
        %v338 = vld [vmem:[%s275 + $0x18] sm:$0xff]
        %v339 = vld [vmem:[%s275 + $0x20] sm:$0xff]
        %v340 = vld [vmem:[%s275 + $0x28] sm:$0xff]
        %v341 = vld [vmem:[%s275 + $0x30] sm:$0xff]
        %v342 = vld [vmem:[%s275 + $0x38] sm:$0xff]
        %v343 = vld [vmem:[#allocation5] sm:$0xff]
        %v344 = vld [vmem:[#allocation5 + $0x8] sm:$0xff]
        %v345 = vld [vmem:[#allocation5 + $0x10] sm:$0xff]
        %v346 = vld [vmem:[#allocation5 + $0x18] sm:$0xff]
        %v347 = vld [vmem:[#allocation5 + $0x20] sm:$0xff]
        %v348 = vld [vmem:[#allocation5 + $0x28] sm:$0xff]
        %v349 = vld [vmem:[#allocation5 + $0x30] sm:$0xff]
        %v350 = vld [vmem:[#allocation5 + $0x38] sm:$0xff]
        %v351 = vld [vmem:[#allocation5 + $0x40] sm:$0xff]
        %v352 = vld [vmem:[#allocation5 + $0x48] sm:$0xff]
        %v353 = vld [vmem:[#allocation5 + $0x50] sm:$0xff]
        %v354 = vld [vmem:[#allocation5 + $0x58] sm:$0xff]
        %v355 = vld [vmem:[#allocation5 + $0x60] sm:$0xff]
        %v356 = vld [vmem:[#allocation5 + $0x68] sm:$0xff]
        %v357 = vld [vmem:[#allocation5 + $0x70] sm:$0xff]
        %v358 = vld [vmem:[#allocation5 + $0x78] sm:$0xff]
        %v359 = vld [vmem:[#allocation5 + $0x80] sm:$0xff]
        %v360 = vld [vmem:[#allocation5 + $0x88] sm:$0xff]
        %v361 = vld [vmem:[#allocation5 + $0x90] sm:$0xff]
        %v362 = vld [vmem:[#allocation5 + $0x98] sm:$0xff]
        %v363 = vld [vmem:[#allocation5 + $0xa0] sm:$0xff]
        %v364 = vld [vmem:[#allocation5 + $0xa8] sm:$0xff]
        %v365 = vld [vmem:[#allocation5 + $0xb0] sm:$0xff]
        %v366 = vld [vmem:[#allocation5 + $0xb8] sm:$0xff]
        %v367 = vld [vmem:[#allocation5 + $0xc0] sm:$0xff]
        %v368 = vld [vmem:[#allocation5 + $0xc8] sm:$0xff]
        %v369 = vld [vmem:[#allocation5 + $0xd0] sm:$0xff]
        %v370 = vld [vmem:[#allocation5 + $0xd8] sm:$0xff]
        %v371 = vld [vmem:[#allocation5 + $0xe0] sm:$0xff]
        %v372 = vld [vmem:[#allocation5 + $0xe8] sm:$0xff]
        %v373 = vld [vmem:[#allocation5 + $0xf0] sm:$0xff]
        %v374 = vld [vmem:[#allocation5 + $0xf8] sm:$0xff]
        %v375 = vld [vmem:[%s319] sm:$0x3]
        %v377 = vlaneseq
        %v378 = vshrl.u32 %v377, 7
        %v379 = vsub.s32 0, %v378
        %v380 = vrot.slane %v375, %v379
        %v381 = vlaneseq
        %v382 = vshrl.u32 %v381, 7
        %v383 = vsub.s32 1, %v382
        %v384 = vrot.slane %v375, %v383
        %387 = vmatprep.subr.mxu0 %v344
        %388 = vmatpush1.msra.mxu0 %v343
        %389 = vmatprep.subr.mxu0 %v346
        %390 = vmatpush1.msra.mxu0 %v345
        %391 = vmatprep.subr.mxu0 %v348
        %392 = vmatpush1.msra.mxu0 %v347
        %393 = vmatprep.subr.mxu0 %v350
        %394 = vmatpush1.msra.mxu0 %v349
        %395 = vmatprep.subr.mxu0 %v352
        %396 = vmatpush1.msra.mxu0 %v351
        %397 = vmatprep.subr.mxu0 %v354
        %398 = vmatpush1.msra.mxu0 %v353
        %399 = vmatprep.subr.mxu0 %v356
        %400 = vmatpush1.msra.mxu0 %v355
        %401 = vmatprep.subr.mxu0 %v358
        %402 = vmatpush1.msra.mxu0 %v357
        %403 = vmatprep.subr.mxu0 %v360
        %404 = vmatpush1.msra.mxu0 %v359
        %405 = vmatprep.subr.mxu0 %v362
        %406 = vmatpush1.msra.mxu0 %v361
        %407 = vmatprep.subr.mxu0 %v364
        %408 = vmatpush1.msra.mxu0 %v363
        %409 = vmatprep.subr.mxu0 %v366
        %410 = vmatpush1.msra.mxu0 %v365
        %411 = vmatprep.subr.mxu0 %v368
        %412 = vmatpush1.msra.mxu0 %v367
        %413 = vmatprep.subr.mxu0 %v370
        %414 = vmatpush1.msra.mxu0 %v369
        %415 = vmatprep.subr.mxu0 %v372
        %416 = vmatpush1.msra.mxu0 %v371
        %417 = vmatprep.subr.mxu0 %v374
        %418 = vmatpush1.msra.mxu0 %v373
        %419 = vmatprep.subr.mxu0 0.0
        %420 = vmatpush1.msra.mxu0 0.0
        %421 = vmatprep.subr.mxu0 0.0
        %422 = vmatpush1.msra.mxu0 0.0
        %423 = vmatprep.subr.mxu0 0.0
        %424 = vmatpush1.msra.mxu0 0.0
        %425 = vmatprep.subr.mxu0 0.0
        %426 = vmatpush1.msra.mxu0 0.0
        %427 = vmatprep.subr.mxu0 0.0
        %428 = vmatpush1.msra.mxu0 0.0
        %429 = vmatprep.subr.mxu0 0.0
        %430 = vmatpush1.msra.mxu0 0.0
        %431 = vmatprep.subr.mxu0 0.0
        %432 = vmatpush1.msra.mxu0 0.0
        %433 = vmatprep.subr.mxu0 0.0
        %434 = vmatpush1.msra.mxu0 0.0
        %435 = vmatprep.subr.mxu0 0.0
        %436 = vmatpush1.msra.mxu0 0.0
        %437 = vmatprep.subr.mxu0 0.0
        %438 = vmatpush1.msra.mxu0 0.0
        %439 = vmatprep.subr.mxu0 0.0
        %440 = vmatpush1.msra.mxu0 0.0
        %441 = vmatprep.subr.mxu0 0.0
        %442 = vmatpush1.msra.mxu0 0.0
        %443 = vmatprep.subr.mxu0 0.0
        %444 = vmatpush1.msra.mxu0 0.0
        %445 = vmatprep.subr.mxu0 0.0
        %446 = vmatpush1.msra.mxu0 0.0
        %447 = vmatprep.subr.mxu0 0.0
        %448 = vmatpush1.msra.mxu0 0.0
        %449 = vmatprep.subr.mxu0 0.0
        %450 = vmatpush1.msra.mxu0 0.0
        %451 = vmatprep.mubr.f32.mxu0 0.0
        %452 = vmatmul.mubr.f32.gmra.mrb[0].mxu0 %v335
        %v453 = vpop.f32.mrb[0].mxu0
        %v454 = vadd.f32 %v380, %v453
        %v455 = vpop.f32.mrb[0].mxu0
        %v456 = vadd.f32 %v384, %v455
        %457 = vmatprep.mubr.f32.mxu0 0.0
        %458 = vmatmul.mubr.f32.gmra.mrb[0].mxu0 %v336
        %v459 = vpop.f32.mrb[0].mxu0
        %v460 = vadd.f32 %v380, %v459
        %v461 = vpop.f32.mrb[0].mxu0
        %v462 = vadd.f32 %v384, %v461
        %463 = vmatprep.mubr.f32.mxu0 0.0
        %464 = vmatmul.mubr.f32.gmra.mrb[0].mxu0 %v337
        %v465 = vpop.f32.mrb[0].mxu0
        %v466 = vadd.f32 %v380, %v465
        %v467 = vpop.f32.mrb[0].mxu0
        %v468 = vadd.f32 %v384, %v467
        %469 = vmatprep.mubr.f32.mxu0 0.0
        %470 = vmatmul.mubr.f32.gmra.mrb[0].mxu0 %v338
        %v471 = vpop.f32.mrb[0].mxu0
        %v472 = vadd.f32 %v380, %v471
        %v473 = vpop.f32.mrb[0].mxu0
        %v474 = vadd.f32 %v384, %v473
        %475 = vmatprep.mubr.f32.mxu0 0.0
        %476 = vmatmul.mubr.f32.gmra.mrb[0].mxu0 %v339
        %v477 = vpop.f32.mrb[0].mxu0
        %v478 = vadd.f32 %v380, %v477
        %v479 = vpop.f32.mrb[0].mxu0
        %v480 = vadd.f32 %v384, %v479
        %481 = vmatprep.mubr.f32.mxu0 0.0
        %482 = vmatmul.mubr.f32.gmra.mrb[0].mxu0 %v340
        %v483 = vpop.f32.mrb[0].mxu0
        %v484 = vadd.f32 %v380, %v483
        %v485 = vpop.f32.mrb[0].mxu0
        %v486 = vadd.f32 %v384, %v485
        %487 = vmatprep.mubr.f32.mxu0 0.0
        %488 = vmatmul.mubr.f32.gmra.mrb[0].mxu0 %v341
        %v489 = vpop.f32.mrb[0].mxu0
        %v490 = vadd.f32 %v380, %v489
        %v491 = vpop.f32.mrb[0].mxu0
        %v492 = vadd.f32 %v384, %v491
        %493 = vmatprep.mubr.f32.mxu0 0.0
        %494 = vmatmul.mubr.f32.gmra.mrb[0].mxu0 %v342
        %v495 = vpop.f32.mrb[0].mxu0
        %v496 = vadd.f32 %v380, %v495
        %v497 = vpop.f32.mrb[0].mxu0
        %v498 = vadd.f32 %v384, %v497
        %499 = vdwg.mxu0
        %v500 = vmax.f32 %v454, 0.0
        %v501 = vmax.f32 %v456, 0.0
        %v502 = vmax.f32 %v460, 0.0
        %v503 = vmax.f32 %v462, 0.0
        %v504 = vmax.f32 %v466, 0.0
        %v505 = vmax.f32 %v468, 0.0
        %v506 = vmax.f32 %v472, 0.0
        %v507 = vmax.f32 %v474, 0.0
        %v508 = vmax.f32 %v478, 0.0
        %v509 = vmax.f32 %v480, 0.0
        %v510 = vmax.f32 %v484, 0.0
        %v511 = vmax.f32 %v486, 0.0
        %v512 = vmax.f32 %v490, 0.0
        %v513 = vmax.f32 %v492, 0.0
        %v514 = vmax.f32 %v496, 0.0
        %v515 = vmax.f32 %v498, 0.0
        %v516 = vld [vmem:[%s313] sm:$0xff]
        %v517 = vld [vmem:[%s313 + $0x8] sm:$0xff]
        %v518 = vld [vmem:[%s313 + $0x10] sm:$0xff]
        %v519 = vld [vmem:[%s313 + $0x18] sm:$0xff]
        %v520 = vld [vmem:[%s313 + $0x20] sm:$0xff]
        %v521 = vld [vmem:[%s313 + $0x28] sm:$0xff]
        %v522 = vld [vmem:[%s313 + $0x30] sm:$0xff]
        %v523 = vld [vmem:[%s313 + $0x38] sm:$0xff]
        %v524 = vld [vmem:[#allocation7] sm:$0xff]
        %v525 = vld [vmem:[#allocation7 + $0x8] sm:$0xff]
        %v526 = vld [vmem:[#allocation7 + $0x10] sm:$0xff]
        %v527 = vld [vmem:[#allocation7 + $0x18] sm:$0xff]
        %v528 = vld [vmem:[#allocation7 + $0x20] sm:$0xff]
        %v529 = vld [vmem:[#allocation7 + $0x28] sm:$0xff]
        %v530 = vld [vmem:[#allocation7 + $0x30] sm:$0xff]
        %v531 = vld [vmem:[#allocation7 + $0x38] sm:$0xff]
        %v532 = vld [vmem:[#allocation7 + $0x40] sm:$0xff]
        %v533 = vld [vmem:[#allocation7 + $0x48] sm:$0xff]
        %v534 = vld [vmem:[#allocation7 + $0x50] sm:$0xff]
        %v535 = vld [vmem:[#allocation7 + $0x58] sm:$0xff]
        %v536 = vld [vmem:[#allocation7 + $0x60] sm:$0xff]
        %v537 = vld [vmem:[#allocation7 + $0x68] sm:$0xff]
        %v538 = vld [vmem:[#allocation7 + $0x70] sm:$0xff]
        %v539 = vld [vmem:[#allocation7 + $0x78] sm:$0xff]
        %v540 = vld [vmem:[#allocation7 + $0x80] sm:$0xff]
        %v541 = vld [vmem:[#allocation7 + $0x88] sm:$0xff]
        %v542 = vld [vmem:[#allocation7 + $0x90] sm:$0xff]
        %v543 = vld [vmem:[#allocation7 + $0x98] sm:$0xff]
        %v544 = vld [vmem:[#allocation7 + $0xa0] sm:$0xff]
        %v545 = vld [vmem:[#allocation7 + $0xa8] sm:$0xff]
        %v546 = vld [vmem:[#allocation7 + $0xb0] sm:$0xff]
        %v547 = vld [vmem:[#allocation7 + $0xb8] sm:$0xff]
        %v548 = vld [vmem:[#allocation7 + $0xc0] sm:$0xff]
        %v549 = vld [vmem:[#allocation7 + $0xc8] sm:$0xff]
        %v550 = vld [vmem:[#allocation7 + $0xd0] sm:$0xff]
        %v551 = vld [vmem:[#allocation7 + $0xd8] sm:$0xff]
        %v552 = vld [vmem:[#allocation7 + $0xe0] sm:$0xff]
        %v553 = vld [vmem:[#allocation7 + $0xe8] sm:$0xff]
        %v554 = vld [vmem:[#allocation7 + $0xf0] sm:$0xff]
        %v555 = vld [vmem:[#allocation7 + $0xf8] sm:$0xff]
        %556 = vmatprep.subr.mxu0 0.0
        %557 = vmatpush1.msra.mxu0 %v524
        %558 = vmatprep.subr.mxu0 0.0
        %559 = vmatpush1.msra.mxu0 %v525
        %560 = vmatprep.subr.mxu0 0.0
        %561 = vmatpush1.msra.mxu0 %v526
        %562 = vmatprep.subr.mxu0 0.0
        %563 = vmatpush1.msra.mxu0 %v527
        %564 = vmatprep.subr.mxu0 0.0
        %565 = vmatpush1.msra.mxu0 %v528
        %566 = vmatprep.subr.mxu0 0.0
        %567 = vmatpush1.msra.mxu0 %v529
        %568 = vmatprep.subr.mxu0 0.0
        %569 = vmatpush1.msra.mxu0 %v530
        %570 = vmatprep.subr.mxu0 0.0
        %571 = vmatpush1.msra.mxu0 %v531
        %572 = vmatprep.subr.mxu0 0.0
        %573 = vmatpush1.msra.mxu0 %v532
        %574 = vmatprep.subr.mxu0 0.0
        %575 = vmatpush1.msra.mxu0 %v533
        %576 = vmatprep.subr.mxu0 0.0
        %577 = vmatpush1.msra.mxu0 %v534
        %578 = vmatprep.subr.mxu0 0.0
        %579 = vmatpush1.msra.mxu0 %v535
        %580 = vmatprep.subr.mxu0 0.0
        %581 = vmatpush1.msra.mxu0 %v536
        %582 = vmatprep.subr.mxu0 0.0
        %583 = vmatpush1.msra.mxu0 %v537
        %584 = vmatprep.subr.mxu0 0.0
        %585 = vmatpush1.msra.mxu0 %v538
        %586 = vmatprep.subr.mxu0 0.0
        %587 = vmatpush1.msra.mxu0 %v539
        %588 = vmatprep.subr.mxu0 0.0
        %589 = vmatpush1.msra.mxu0 %v540
        %590 = vmatprep.subr.mxu0 0.0
        %591 = vmatpush1.msra.mxu0 %v541
        %592 = vmatprep.subr.mxu0 0.0
        %593 = vmatpush1.msra.mxu0 %v542
        %594 = vmatprep.subr.mxu0 0.0
        %595 = vmatpush1.msra.mxu0 %v543
        %596 = vmatprep.subr.mxu0 0.0
        %597 = vmatpush1.msra.mxu0 %v544
        %598 = vmatprep.subr.mxu0 0.0
        %599 = vmatpush1.msra.mxu0 %v545
        %600 = vmatprep.subr.mxu0 0.0
        %601 = vmatpush1.msra.mxu0 %v546
        %602 = vmatprep.subr.mxu0 0.0
        %603 = vmatpush1.msra.mxu0 %v547
        %604 = vmatprep.subr.mxu0 0.0
        %605 = vmatpush1.msra.mxu0 %v548
        %606 = vmatprep.subr.mxu0 0.0
        %607 = vmatpush1.msra.mxu0 %v549
        %608 = vmatprep.subr.mxu0 0.0
        %609 = vmatpush1.msra.mxu0 %v550
        %610 = vmatprep.subr.mxu0 0.0
        %611 = vmatpush1.msra.mxu0 %v551
        %612 = vmatprep.subr.mxu0 0.0
        %613 = vmatpush1.msra.mxu0 %v552
        %614 = vmatprep.subr.mxu0 0.0
        %615 = vmatpush1.msra.mxu0 %v553
        %616 = vmatprep.subr.mxu0 0.0
        %617 = vmatpush1.msra.mxu0 %v554
        %618 = vmatprep.subr.mxu0 0.0
        %619 = vmatpush1.msra.mxu0 %v555
        %620 = vmatprep.mubr.f32.mxu0 %v501
        %621 = vmatmul.mubr.f32.gmra.mrb[0].mxu0 %v500
        %v622 = vpop.f32.mrb[0].mxu0
        %v623 = vadd.f32 0.0, %v622
        %v624 = vpop.f32.mrb[0].mxu0
        %625 = vmatprep.mubr.f32.mxu0 %v503
        %626 = vmatmul.mubr.f32.gmra.mrb[0].mxu0 %v502
        %v627 = vpop.f32.mrb[0].mxu0
        %v628 = vadd.f32 0.0, %v627
        %v629 = vpop.f32.mrb[0].mxu0
        %630 = vmatprep.mubr.f32.mxu0 %v505
        %631 = vmatmul.mubr.f32.gmra.mrb[0].mxu0 %v504
        %v632 = vpop.f32.mrb[0].mxu0
        %v633 = vadd.f32 0.0, %v632
        %v634 = vpop.f32.mrb[0].mxu0
        %635 = vmatprep.mubr.f32.mxu0 %v507
        %636 = vmatmul.mubr.f32.gmra.mrb[0].mxu0 %v506
        %v637 = vpop.f32.mrb[0].mxu0
        %v638 = vadd.f32 0.0, %v637
        %v639 = vpop.f32.mrb[0].mxu0
        %640 = vmatprep.mubr.f32.mxu0 %v509
        %641 = vmatmul.mubr.f32.gmra.mrb[0].mxu0 %v508
        %v642 = vpop.f32.mrb[0].mxu0
        %v643 = vadd.f32 0.0, %v642
        %v644 = vpop.f32.mrb[0].mxu0
        %645 = vmatprep.mubr.f32.mxu0 %v511
        %646 = vmatmul.mubr.f32.gmra.mrb[0].mxu0 %v510
        %v647 = vpop.f32.mrb[0].mxu0
        %v648 = vadd.f32 0.0, %v647
        %v649 = vpop.f32.mrb[0].mxu0
        %650 = vmatprep.mubr.f32.mxu0 %v513
        %651 = vmatmul.mubr.f32.gmra.mrb[0].mxu0 %v512
        %v652 = vpop.f32.mrb[0].mxu0
        %v653 = vadd.f32 0.0, %v652
        %v654 = vpop.f32.mrb[0].mxu0
        %655 = vmatprep.mubr.f32.mxu0 %v515
        %656 = vmatmul.mubr.f32.gmra.mrb[0].mxu0 %v514
        %v657 = vpop.f32.mrb[0].mxu0
        %v658 = vadd.f32 0.0, %v657
        %v659 = vpop.f32.mrb[0].mxu0
        %660 = vdwg.mxu0
        %v661 = vadd.f32 %v516, %v623
        %v662 = vadd.f32 %v517, %v628
        %v663 = vadd.f32 %v518, %v633
        %v664 = vadd.f32 %v519, %v638
        %v665 = vadd.f32 %v520, %v643
        %v666 = vadd.f32 %v521, %v648
        %v667 = vadd.f32 %v522, %v653
        %v668 = vadd.f32 %v523, %v658
        %669 = vst [vmem:[%s313] sm:$0xff] %v661
        %670 = vst [vmem:[%s313 + $0x8] sm:$0xff] %v662
        %671 = vst [vmem:[%s313 + $0x10] sm:$0xff] %v663
        %672 = vst [vmem:[%s313 + $0x18] sm:$0xff] %v664
        %673 = vst [vmem:[%s313 + $0x20] sm:$0xff] %v665
        %674 = vst [vmem:[%s313 + $0x28] sm:$0xff] %v666
        %675 = vst [vmem:[%s313 + $0x30] sm:$0xff] %v667
        %676 = vst [vmem:[%s313 + $0x38] sm:$0xff] %v668
        // Predicated region
        $region57: #{mlp_forward.1} parent=39 // pred_check
          %p677 = pneg %p323
        $region58: #{mlp_forward.1} parent=39 // pred_check_branch
          %679 = sbr.rel (%p677) target = $region60
        $region59: #{mlp_forward.1} parent=39 // pred_region
          %v680 = vld [vmem:[%s313] sm:$0xff]
          %v681 = vld [vmem:[%s313 + $0x8] sm:$0xff]
          %v682 = vld [vmem:[%s313 + $0x10] sm:$0xff]
          %v683 = vld [vmem:[%s313 + $0x18] sm:$0xff]
          %v684 = vld [vmem:[%s313 + $0x20] sm:$0xff]
          %v685 = vld [vmem:[%s313 + $0x28] sm:$0xff]
          %v686 = vld [vmem:[%s313 + $0x30] sm:$0xff]
          %v687 = vld [vmem:[%s313 + $0x38] sm:$0xff]
          %v688 = vld [vmem:[%s4] sm:$0x1]
          %v690 = vlaneseq
          %v691 = vshrl.u32 %v690, 7
          %v692 = vsub.s32 0, %v691
          %v693 = vrot.slane %v688, %v692
          %v695 = vadd.f32 %v680, %v693
          %v696 = vadd.f32 %v681, %v693
          %v697 = vadd.f32 %v682, %v693
          %v698 = vadd.f32 %v683, %v693
          %v699 = vadd.f32 %v684, %v693
          %v700 = vadd.f32 %v685, %v693
          %v701 = vadd.f32 %v686, %v693
          %v702 = vadd.f32 %v687, %v693
          %703 = vst [vmem:[%s313] sm:$0xff] %v695
          %704 = vst [vmem:[%s313 + $0x8] sm:$0xff] %v696
          %705 = vst [vmem:[%s313 + $0x10] sm:$0xff] %v697
          %706 = vst [vmem:[%s313 + $0x18] sm:$0xff] %v698
          %707 = vst [vmem:[%s313 + $0x20] sm:$0xff] %v699
          %708 = vst [vmem:[%s313 + $0x28] sm:$0xff] %v700
          %709 = vst [vmem:[%s313 + $0x30] sm:$0xff] %v701
          %710 = vst [vmem:[%s313 + $0x38] sm:$0xff] %v702
        $region60: #{mlp_forward.1} parent=39 // pred_fallthru
          _
        %s711 = sand.u32 %s168, 1
        %s712 = scalar_lea.sflag [#allocation4], %s711
        %s713 = sand.u32 %s168, 1
        %s714 = smul.addr %s713, 64
        %s715 = scalar_lea.vmem [#allocation8], %s714
        // Predicated region
        $region61: #{mlp_forward.1} parent=39 // pred_check
          %p716 = pneg %p178
        $region62: #{mlp_forward.1} parent=39 // pred_check_branch
          %718 = sbr.rel (%p716) target = $region64
        $region63: #{mlp_forward.1} parent=39 // pred_region
          %s719 = smul.u32 8, %s27
          %s721 = ssub.s32 1024, 1024
          %722 = vsyncadd %s712, %s721
          %s723 = smul.addr %s719, 128
          %s724 = scalar_lea.hbm %s5, %s723
          %s725 = sshll.u32 %s715, 4
          %s726 = int_to_ptr.vmem [resolvable:$true] %s725
          %731 = dma.vmem_to_hbm [thread:$0]  %s726, 1024, %s724, %s712, 128, 128, 8
        $region64: #{mlp_forward.1} parent=39 // pred_fallthru
          _
      $region40: #{mlp_forward.1} parent=5 // pred_fallthru
        _
      %p732 = scmp.le.s32.totalorder 2, %s18
      // Predicated region
      $region65: #{mlp_forward.1} parent=5 // pred_check
        %p733 = pneg %p732
      $region66: #{mlp_forward.1} parent=5 // pred_check_branch
        %735 = sbr.rel (%p733) target = $region68
      $region67: #{mlp_forward.1} parent=5 // pred_region
        %s736 = ssub.s32 %s18, 2
        // Predicated region
        $region69: #{mlp_forward.1} parent=67 // pred_check
          %p737 = pneg %p184
        $region70: #{mlp_forward.1} parent=67 // pred_check_branch
          %739 = sbr.rel (%p737) target = $region72
        $region71: #{mlp_forward.1} parent=67 // pred_region
          %s740 = sand.u32 %s169, 1
          %s741 = scalar_lea.sflag [#allocation4], %s740
          %s742 = sand.u32 %s169, 1
          %s743 = smul.addr %s742, 64
          %s744 = scalar_lea.vmem [#allocation8], %s743
          %745 = dma.done %s741, 1024
        $region72: #{mlp_forward.1} parent=67 // pred_fallthru
          _
      $region68: #{mlp_forward.1} parent=5 // pred_fallthru
        _
    $region6: #{mlp_forward.1} parent=1 // loop_footer
      %s22 = sadd.s32 1, %s18
    $region7: #{mlp_forward.1} parent=1 // loop_footer_branch
      %17 = sbr.rel target = $region3
    $region8: #{mlp_forward.1} parent=1 // loop_exit
      _
    %746 = vsyncpa [#allocation3], 1
    %s747 = scalar_lea.sflag [#allocation3], 1
    %748 = vsyncpa %s747, 1
    %749 = vsyncpa [#allocation6], 1
    %750 = vsyncpa [#allocation4], 1
    %s751 = scalar_lea.sflag [#allocation4], 1
    %752 = vsyncpa %s751, 1

</llo_original>
